<compile_context>
chip_gen: v7x
topology: tpu7x:2x2x1
jax: 0.10.0
libtpu: 0.0.40
codegen_flags: <defaults>
</compile_context>

<pallas_src>
import functools

import jax
import jax.numpy as jnp
from jax.experimental import pallas as pl
from jax.experimental.pallas import tpu as pltpu


def _round_up(x, m):
    return (x + m - 1) // m * m


def _vmem_capacity_bytes():
    try:
        v = getattr(pltpu.get_tpu_info(), "vmem_capacity_bytes", None)
        if v:
            return int(v)
    except Exception:
        pass
    return 128 << 20  # v5e/v6e default; safe fallback


def _detected_tensorcores():
    # Attribute name differs across versions; fall back to 1 (always correct).
    try:
        info = pltpu.get_tpu_info()
        for name in ("num_cores", "num_tensorcores", "tensorcores_per_chip",
                     "cores_per_chip", "core_count"):
            v = getattr(info, name, None)
            if v:
                return max(1, int(v))
    except Exception:
        pass
    return 1


def pg_loss_kernel(obs_ref, w_ref, b_ref, actadv_ref, out_ref, acc_ref,
                   *, batch_size):
    c = pl.program_id(0)                 # core-split axis ("parallel")
    i = pl.program_id(1)                 # batch-tile axis ("arbitrary")
    tiles_per_core = pl.num_programs(1)

    @pl.when(i == 0)
    def _init():
        acc_ref[0] = jnp.float32(0.0)

    # Cast at the VMEM->vreg boundary (no extra HBM pass in the wrapper);
    # MXU consumes bf16, accumulates f32.
    obs = obs_ref[...].astype(jnp.bfloat16)
    w = w_ref[...].astype(jnp.bfloat16)
    logits = jnp.dot(obs, w, preferred_element_type=jnp.float32)
    logits = logits + b_ref[...]                       # (TB, A) + (1, A)

    # Numerically stable log-softmax pieces; never materialize log_softmax.
    m = jnp.max(logits, axis=-1, keepdims=True)        # (TB, 1)
    shifted = logits - m                               # (TB, A)
    lse = jnp.log(jnp.sum(jnp.exp(shifted), axis=-1, keepdims=True))

    tb, a = logits.shape
    act = actadv_ref[:, 0:1]                                  # (TB, 1) int32
    adv = pltpu.bitcast(actadv_ref[:, 1:2], jnp.float32)      # (TB, 1) f32 bits

    # Gather shifted logit at the taken action via one-hot + XLU row-reduce
    # (full log_softmax never materialized).
    col = jax.lax.broadcasted_iota(jnp.int32, (tb, a), 1)
    onehot = (col == act).astype(jnp.float32)
    shifted_at_act = jnp.sum(onehot * shifted, axis=-1, keepdims=True)
    logp = shifted_at_act - lse                         # (TB, 1)

    # Row-validity mask: kills (a) garbage rows of the ragged last tile (obs is
    # NOT padded in HBM) and (b) duplicate clamped tiles when the tile range
    # splits unevenly across core splits.  Applied to the whole contribution so
    # NaN/Inf from garbage rows cannot leak through 0*NaN.
    tile_idx = c * tiles_per_core + i                   # UNclamped global tile
    row = tile_idx * tb + jax.lax.broadcasted_iota(jnp.int32, (tb, 1), 0)
    contrib = jnp.where(row < batch_size, adv * logp, 0.0)

    acc_ref[0] += -jnp.sum(contrib)

    @pl.when(i == tiles_per_core - 1)
    def _store():
        # One lane-dense (8, 128) store per core split; wrapper reads [0, 0].
        out_ref[...] = jnp.full(out_ref.shape, acc_ref[0], dtype=out_ref.dtype)


def pg_loss(observations, actions, advantages, w, b, *,
            max_block_rows=None, core_splits=None):
    """observations: [B, D], actions: [B] int, advantages: [B], w: [D, A],
    b: [A].  Returns scalar pi_err = -advantages . log_prob(actions)."""
    B, D = observations.shape
    A = w.shape[1]
    obs_isz = jnp.dtype(observations.dtype).itemsize
    w_isz = jnp.dtype(w.dtype).itemsize

    # ---- per-generation tile sizing --------------------------------------
    vmem_cap = _vmem_capacity_bytes()
    # v7x (64 MiB): request cap ~44 MiB, double-buffered obs target 16 MiB.
    # v5e/v6e (128 MiB): request cap ~89 MiB, double-buffered obs target 32 MiB.
    vmem_request_cap = min(int(vmem_cap * 0.70), 96 << 20)
    dbuf_obs_target = vmem_cap // 4

    TB = (max(8, dbuf_obs_target // (2 * D * obs_isz)) // 8) * 8
    if max_block_rows is not None:
        TB = min(TB, max(8, (int(max_block_rows) // 8) * 8))
    TB = max(8, min(TB, 32768))
    if B >= 8:
        TB = min(TB, (B // 8) * 8)        # keep blocks inside the array
    n_tiles = -(-B // TB)

    # ---- core split (v7x megacore) ---------------------------------------
    if core_splits is None:
        core_splits = _detected_tensorcores()
    core_splits = max(1, min(int(core_splits), n_tiles))
    tiles_per_core = -(-n_tiles // core_splits)

    # ---- small side inputs (tiny; heavy [B, D] stream passed untouched) ---
    b2 = b.reshape(1, A).astype(jnp.float32)
    act_i32 = actions.reshape(B).astype(jnp.int32)
    adv_bits = jax.lax.bitcast_convert_type(
        advantages.reshape(B).astype(jnp.float32), jnp.int32)
    actadv = jnp.stack([act_i32, adv_bits], axis=-1)          # (B, 2) int32

    # ---- VMEM budget -------------------------------------------------------
    usage = (2 * TB * D * obs_isz            # double-buffered obs tiles
             + 2 * TB * 2 * 4                # double-buffered packed act/adv
             + 2 * D * A * w_isz + 2 * A * 4  # resident W, b (2 bufs alloc'd)
             + 2 * 8 * 128 * 4)              # output block
    vmem_limit = int(min(max(usage + (2 << 20), 8 << 20), vmem_request_cap))

    cost = pl.CostEstimate(
        flops=2 * B * D * A + 8 * B * A,
        transcendentals=B * A + B,            # exp over logits + log of sum
        bytes_accessed=(observations.size * obs_isz + w.size * w_isz
                        + A * 4 + B * 2 * 4 + core_splits * 8 * 128 * 4),
    )

    def data_map(c, i):
        # Clamp duplicate tiles from an uneven core split back in-bounds; the
        # kernel's row mask zeroes their contribution.
        return (jnp.minimum(c * tiles_per_core + i, n_tiles - 1), 0)

    out = pl.pallas_call(
        functools.partial(pg_loss_kernel, batch_size=B),
        out_shape=jax.ShapeDtypeStruct((core_splits * 8, 128), jnp.float32),
        grid=(core_splits, tiles_per_core),
        in_specs=[
            pl.BlockSpec((TB, D), data_map),              # observations (tiled)
            pl.BlockSpec((D, A), lambda c, i: (0, 0)),    # W (resident)
            pl.BlockSpec((1, A), lambda c, i: (0, 0)),    # b (resident)
            pl.BlockSpec((TB, 2), data_map),              # packed act/adv
        ],
        out_specs=pl.BlockSpec((8, 128), lambda c, i: (c, 0)),
        scratch_shapes=[pltpu.SMEM((1,), jnp.float32)],
        compiler_params=pltpu.CompilerParams(
            dimension_semantics=("parallel", "arbitrary"),
            vmem_limit_bytes=vmem_limit,
        ),
        cost_estimate=cost,
    )(observations, w, b2, actadv)

    partials = out.reshape(core_splits, 8, 128)[:, 0, 0]
    return jnp.sum(partials)


def pg_loss_ref(observations, actions, advantages, w, b):
    logits = jnp.dot(observations.astype(jnp.bfloat16), w.astype(jnp.bfloat16),
                     preferred_element_type=jnp.float32) + b.astype(jnp.float32)
    logp_all = jax.nn.log_softmax(logits, axis=-1)
    logp = jnp.take_along_axis(
        logp_all, actions[:, None].astype(jnp.int32), axis=-1)[:, 0]
    return -jnp.dot(advantages.astype(jnp.float32), logp)


if __name__ == "__main__":
    # Small demo shapes; B deliberately not tile-aligned in configs (2)/(3) so
    # the ragged-tile mask, multi-step accumulation and the core-split path
    # (duplicate clamped tile) are all exercised.
    B, D, A = 200, 64, 16   # batch, obs dim, num actions

    key = jax.random.PRNGKey(0)
    k_obs, k_w, k_b, k_act, k_adv = jax.random.split(key, 5)

    observations = jax.random.normal(k_obs, (B, D), dtype=jnp.float32)
    w = 0.1 * jax.random.normal(k_w, (D, A), dtype=jnp.float32)   # "policy model"
    b = 0.01 * jax.random.normal(k_b, (A,), dtype=jnp.float32)
    actions = jax.random.randint(k_act, (B,), 0, A, dtype=jnp.int32)
    advantages = jax.random.normal(k_adv, (B,), dtype=jnp.float32)

    ref = pg_loss_ref(observations, actions, advantages, w, b)

    # (1) auto-sized tile + auto core detection (single big tile here).
    out1 = jax.block_until_ready(pg_loss(observations, actions, advantages, w, b))
    # (2) small tile -> multi-step accumulation + ragged last tile masking.
    out2 = jax.block_until_ready(
        pg_loss(observations, actions, advantages, w, b, max_block_rows=96))
    # (3) forced 2-way core split (uneven -> clamped duplicate tile masked);
    #     also correct on 1-TC chips (splits just run sequentially).
    out3 = jax.block_until_ready(
        pg_loss(observations, actions, advantages, w, b,
                max_block_rows=96, core_splits=2))

    for out in (out1, out2, out3):
        assert jnp.allclose(out, ref, rtol=1e-3, atol=2e-3), (out, ref)

    print("KERNEL_OK")
</pallas_src>

<mosaic_0001>
module attributes {stable_mosaic.version = 11 : i64} {
  func.func @pg_loss_kernel(%arg0: i32, %arg1: i32, %arg2: memref<200x64xf32, #tpu.memory_space<vmem>>, %arg3: memref<64x16xf32, #tpu.memory_space<vmem>>, %arg4: memref<1x16xf32, #tpu.memory_space<vmem>>, %arg5: memref<200x2xi32, #tpu.memory_space<vmem>>, %arg6: memref<8x128xf32, #tpu.memory_space<vmem>>, %arg7: memref<1xf32, #tpu.memory_space<smem>>) attributes {dimension_semantics = [#tpu.dimension_semantics<parallel>, #tpu.dimension_semantics<arbitrary>], iteration_bounds = array<i64: 1, 1>, scalar_prefetch = 0 : i64, scratch_operands = 1 : i64, tpu.core_type = #tpu.core_type<tc>, window_params = [{transform_indices = @transform_0, window_bounds = array<i64: 200, 64>}, {pipeline_mode = #tpu.pipeline_mode<synchronous>, transform_indices = @transform_1, window_bounds = array<i64: 64, 16>}, {pipeline_mode = #tpu.pipeline_mode<synchronous>, transform_indices = @transform_2, window_bounds = array<i64: 1, 16>}, {transform_indices = @transform_3, window_bounds = array<i64: 200, 2>}, {transform_indices = @transform_4, window_bounds = array<i64: 8, 128>}]} {
    %c0_i32 = arith.constant 0 : i32
    %0 = arith.cmpi eq, %arg1, %c0_i32 : i32
    %1 = arith.extui %0 : i1 to i32
    %c0_i32_0 = arith.constant 0 : i32
    %2 = arith.cmpi ne, %1, %c0_i32_0 : i32
    scf.if %2 {
      %cst_20 = arith.constant 0.000000e+00 : f32
      %c0_21 = arith.constant 0 : index
      %53 = memref.load %arg7[%c0_21] : memref<1xf32, #tpu.memory_space<smem>>
      memref.store %cst_20, %arg7[%c0_21] : memref<1xf32, #tpu.memory_space<smem>>
    } else {
    }
    %c0 = arith.constant 0 : index
    %c0_1 = arith.constant 0 : index
    %3 = vector.load %arg2[%c0, %c0_1] : memref<200x64xf32, #tpu.memory_space<vmem>>, vector<200x64xf32>
    %4 = arith.truncf %3 : vector<200x64xf32> to vector<200x64xbf16>
    %c0_2 = arith.constant 0 : index
    %c0_3 = arith.constant 0 : index
    %5 = vector.load %arg3[%c0_2, %c0_3] : memref<64x16xf32, #tpu.memory_space<vmem>>, vector<64x16xf32>
    %6 = arith.truncf %5 : vector<64x16xf32> to vector<64x16xbf16>
    %cst = arith.constant dense<0.000000e+00> : vector<200x16xf32>
    %7 = tpu.matmul %4, %6, %cst {dimension_numbers = #tpu.dot_dimension_numbers<[1], [0], [0], [1], [0, 0, 1, 1], [], []>} : vector<200x64xbf16>, vector<64x16xbf16>, vector<200x16xf32> -> vector<200x16xf32>
    %c0_4 = arith.constant 0 : index
    %c0_5 = arith.constant 0 : index
    %8 = vector.load %arg4[%c0_4, %c0_5] : memref<1x16xf32, #tpu.memory_space<vmem>>, vector<1x16xf32>
    %9 = vector.broadcast %8 : vector<1x16xf32> to vector<200x16xf32>
    %10 = arith.addf %7, %9 : vector<200x16xf32>
    %cst_6 = arith.constant dense<0xFF800000> : vector<200xf32>
    %11 = vector.multi_reduction <maximumf>, %10, %cst_6 [1] : vector<200x16xf32> to vector<200xf32>
    %12 = vector.shape_cast %11 : vector<200xf32> to vector<200x1xf32>
    %13 = vector.broadcast %12 : vector<200x1xf32> to vector<200x16xf32>
    %14 = arith.subf %10, %13 : vector<200x16xf32>
    %15 = math.exp %14 : vector<200x16xf32>
    %cst_7 = arith.constant dense<0.000000e+00> : vector<200xf32>
    %16 = vector.multi_reduction <add>, %15, %cst_7 [1] : vector<200x16xf32> to vector<200xf32>
    %17 = vector.shape_cast %16 : vector<200xf32> to vector<200x1xf32>
    %18 = math.log %17 : vector<200x1xf32>
    %c0_8 = arith.constant 0 : index
    %c0_9 = arith.constant 0 : index
    %19 = vector.load %arg5[%c0_8, %c0_9] : memref<200x2xi32, #tpu.memory_space<vmem>>, vector<200x1xi32>
    %c0_10 = arith.constant 0 : index
    %c1 = arith.constant 1 : index
    %20 = vector.load %arg5[%c0_10, %c1] : memref<200x2xi32, #tpu.memory_space<vmem>>, vector<200x1xi32>
    %21 = tpu.bitcast %20 : vector<200x1xi32> -> vector<200x1xf32>
    %22 = tpu.iota {dimensions = array<i32: 1>} : vector<200x16xi32>
    %23 = vector.broadcast %19 : vector<200x1xi32> to vector<200x16xi32>
    %24 = arith.cmpi eq, %22, %23 : vector<200x16xi32>
    %25 = arith.extui %24 : vector<200x16xi1> to vector<200x16xi32>
    %26 = arith.sitofp %25 : vector<200x16xi32> to vector<200x16xf32>
    %27 = arith.mulf %26, %14 : vector<200x16xf32>
    %cst_11 = arith.constant dense<0.000000e+00> : vector<200xf32>
    %28 = vector.multi_reduction <add>, %27, %cst_11 [1] : vector<200x16xf32> to vector<200xf32>
    %29 = vector.shape_cast %28 : vector<200xf32> to vector<200x1xf32>
    %30 = arith.subf %29, %18 : vector<200x1xf32>
    %c1_i32 = arith.constant 1 : i32
    %31 = arith.muli %arg0, %c1_i32 : i32
    %32 = arith.addi %31, %arg1 : i32
    %c200_i32 = arith.constant 200 : i32
    %33 = arith.muli %32, %c200_i32 : i32
    %34 = tpu.iota {dimensions = array<i32: 0>} : vector<200x1xi32>
    %35 = vector.broadcast %33 : i32 to vector<200x1xi32>
    %36 = arith.addi %35, %34 : vector<200x1xi32>
    %c200_i32_12 = arith.constant 200 : i32
    %37 = vector.broadcast %c200_i32_12 : i32 to vector<200x1xi32>
    %38 = arith.cmpi slt, %36, %37 : vector<200x1xi32>
    %39 = arith.mulf %21, %30 : vector<200x1xf32>
    %cst_13 = arith.constant 0.000000e+00 : f32
    %40 = vector.broadcast %cst_13 : f32 to vector<200x1xf32>
    %41 = arith.select %38, %39, %40 : vector<200x1xi1>, vector<200x1xf32>
    %c0_14 = arith.constant 0 : index
    %42 = memref.load %arg7[%c0_14] : memref<1xf32, #tpu.memory_space<smem>>
    %43 = vector.shape_cast %41 : vector<200x1xf32> to vector<1x200x1xf32>
    %cst_15 = arith.constant dense<0.000000e+00> : vector<1xf32>
    %44 = vector.multi_reduction <add>, %43, %cst_15 [1, 2] : vector<1x200x1xf32> to vector<1xf32>
    %45 = vector.shape_cast %44 : vector<1xf32> to vector<1x1x1xf32>
    %46 = vector.extract %45[0, 0, 0] : f32 from vector<1x1x1xf32>
    %cst_16 = arith.constant 0.000000e+00 : f32
    %47 = arith.subf %cst_16, %46 : f32
    %48 = arith.addf %42, %47 : f32
    %c0_17 = arith.constant 0 : index
    %49 = memref.load %arg7[%c0_17] : memref<1xf32, #tpu.memory_space<smem>>
    memref.store %48, %arg7[%c0_17] : memref<1xf32, #tpu.memory_space<smem>>
    %c0_i32_18 = arith.constant 0 : i32
    %50 = arith.cmpi eq, %arg1, %c0_i32_18 : i32
    %51 = arith.extui %50 : i1 to i32
    %c0_i32_19 = arith.constant 0 : i32
    %52 = arith.cmpi ne, %51, %c0_i32_19 : i32
    scf.if %52 {
      %c0_20 = arith.constant 0 : index
      %53 = memref.load %arg7[%c0_20] : memref<1xf32, #tpu.memory_space<smem>>
      %54 = vector.broadcast %53 : f32 to vector<8x128xf32>
      %c0_21 = arith.constant 0 : index
      %c0_22 = arith.constant 0 : index
      %55 = vector.load %arg6[%c0_21, %c0_22] : memref<8x128xf32, #tpu.memory_space<vmem>>, vector<8x128xf32>
      tpu.vector_store %arg6[%c0_21, %c0_22], %54 {strides = array<i32>} : memref<8x128xf32, #tpu.memory_space<vmem>>, vector<8x128xf32>,
    } else {
    }
    return
  }
  func.func @transform_0(%arg0: i32, %arg1: i32) -> (i32, i32) {
    %c1_i32 = arith.constant 1 : i32
    %0 = arith.muli %arg0, %c1_i32 : i32
    %1 = arith.addi %0, %arg1 : i32
    %c0_i32 = arith.constant 0 : i32
    %2 = arith.minsi %1, %c0_i32 : i32
    %c0_i32_0 = arith.constant 0 : i32
    %c0_i32_1 = arith.constant 0 : i32
    return %2, %c0_i32_0 : i32, i32
  }
  func.func @transform_1(%arg0: i32, %arg1: i32) -> (i32, i32) {
    %c0_i32 = arith.constant 0 : i32
    %c0_i32_0 = arith.constant 0 : i32
    %c0_i32_1 = arith.constant 0 : i32
    return %c0_i32, %c0_i32_0 : i32, i32
  }
  func.func @transform_2(%arg0: i32, %arg1: i32) -> (i32, i32) {
    %c0_i32 = arith.constant 0 : i32
    %c0_i32_0 = arith.constant 0 : i32
    %c0_i32_1 = arith.constant 0 : i32
    return %c0_i32, %c0_i32_0 : i32, i32
  }
  func.func @transform_3(%arg0: i32, %arg1: i32) -> (i32, i32) {
    %c1_i32 = arith.constant 1 : i32
    %0 = arith.muli %arg0, %c1_i32 : i32
    %1 = arith.addi %0, %arg1 : i32
    %c0_i32 = arith.constant 0 : i32
    %2 = arith.minsi %1, %c0_i32 : i32
    %c0_i32_0 = arith.constant 0 : i32
    %c0_i32_1 = arith.constant 0 : i32
    return %2, %c0_i32_0 : i32, i32
  }
  func.func @transform_4(%arg0: i32, %arg1: i32) -> (i32, i32) {
    %c0_i32 = arith.constant 0 : i32
    %c0_i32_0 = arith.constant 0 : i32
    return %arg0, %c0_i32 : i32, i32
  }
}

</mosaic_0001>

<llo_original>
// kernel: tpu_custom_call.1
$region0: #{tpu_custom_call.1}
  #allocation0 [shape = 'u32[]', space=smem, size = 0x4, offset = 0x4, fixed_abs, tag = 'smem constant byte address 0x4 - core index']
  #allocation1 [shape = 'u32[144,128]{1,0:T(1,128)}', space=vmem, size = 0x12000, scoped, tag = 'internal scratch']
  #allocation2 [shape = 'f32[1]{0:T(128)}', space=smem, size = 0x200, scoped, tag = 'scratch operand']
  %s0 = inlined_call_operand.vmem [shape: f32[200,64], index: 0, kind: input, shape index: {}]
  %s1 = inlined_call_operand.vmem [shape: f32[64,16], index: 1, kind: input, shape index: {}]
  %s2 = inlined_call_operand.vmem [shape: f32[1,16], index: 2, kind: input, shape index: {}]
  %s3 = inlined_call_operand.vmem [shape: s32[200,2], index: 3, kind: input, shape index: {}]
  %s4 = inlined_call_operand.hbm [shape: f32[8,128], index: 4, kind: output, shape index: {}]
  %s5 = sld [smem:[#allocation0]]
  $region34: #{tpu_custom_call.1} parent=0
    _
  %s7 = ssub.s32 1, %s5
  %s8 = scalar_select 0, %s7, %s5
  $region1: #{tpu_custom_call.1} parent=0
    #allocation3 [shape = 'u8[4096]{0}', space=vmem, size = 0x1000, scoped, tag = 'output window, operand 0, single buffered']
    #allocation4 [shape = 's32[1]{0}', space=sflag, size = 0x4, scoped, tag = 'scoped memory for tpu_custom_call.1']
    %9 = vsyncpa [#allocation4], 0
    // Predicated region
    $region2: #{tpu_custom_call.1} parent=1 // pred_check
      _
    $region3: #{tpu_custom_call.1} parent=1 // pred_check_branch
      %11 = sbr.rel (0) target = $region5
    $region4: #{tpu_custom_call.1} parent=1 // pred_region
      %s12 = sadd.s32 0, 0
      %p13 = scmp.lt.s32.totalorder %s12, 0
      %s14 = scalar_select %p13, %s12, 0
      %s15 = smul.u32 25, %s14
      %p16 = scmp.lt.s32.totalorder %s15, 24
      %s17 = scalar_select %p16, %s15, 24
      %s18 = smul.addr %s17, 8
      %s19 = scalar_lea.vmem %s0, %s18
      %s20 = sadd.s32 0, 0
      %p21 = scmp.lt.s32.totalorder %s20, 0
      %s22 = scalar_select %p21, %s20, 0
      %s23 = smul.u32 25, %s22
    $region5: #{tpu_custom_call.1} parent=1 // pred_fallthru
      _
    // Predicated region
    $region6: #{tpu_custom_call.1} parent=1 // pred_check
      _
    $region7: #{tpu_custom_call.1} parent=1 // pred_check_branch
      %25 = sbr.rel (0) target = $region9
    $region8: #{tpu_custom_call.1} parent=1 // pred_region
      _
    $region9: #{tpu_custom_call.1} parent=1 // pred_fallthru
      _
    // Predicated region
    $region10: #{tpu_custom_call.1} parent=1 // pred_check
      _
    $region11: #{tpu_custom_call.1} parent=1 // pred_check_branch
      %27 = sbr.rel (0) target = $region13
    $region12: #{tpu_custom_call.1} parent=1 // pred_region
      _
    $region13: #{tpu_custom_call.1} parent=1 // pred_fallthru
      _
    // Predicated region
    $region14: #{tpu_custom_call.1} parent=1 // pred_check
      _
    $region15: #{tpu_custom_call.1} parent=1 // pred_check_branch
      %29 = sbr.rel (0) target = $region17
    $region16: #{tpu_custom_call.1} parent=1 // pred_region
      %s30 = sadd.s32 0, 0
      %p31 = scmp.lt.s32.totalorder %s30, 0
      %s32 = scalar_select %p31, %s30, 0
      %s33 = smul.u32 25, %s32
      %p34 = scmp.lt.s32.totalorder %s33, 24
      %s35 = scalar_select %p34, %s33, 24
      %s36 = smul.addr %s35, 8
      %s37 = scalar_lea.vmem %s3, %s36
      %s38 = sadd.s32 0, 0
      %p39 = scmp.lt.s32.totalorder %s38, 0
      %s40 = scalar_select %p39, %s38, 0
      %s41 = smul.u32 25, %s40
    $region17: #{tpu_custom_call.1} parent=1 // pred_fallthru
      _
    %s42 = sadd.s32 0, 0
    %p43 = scmp.lt.s32.totalorder %s42, 0
    %s44 = scalar_select %p43, %s42, 0
    %s45 = smul.u32 25, %s44
    %p46 = scmp.lt.s32.totalorder %s45, 24
    %s47 = scalar_select %p46, %s45, 24
    %s48 = smul.addr %s47, 8
    %s49 = scalar_lea.vmem %s0, %s48
    %s50 = sadd.s32 0, 0
    %p51 = scmp.lt.s32.totalorder %s50, 0
    %s52 = scalar_select %p51, %s50, 0
    %s53 = smul.u32 25, %s52
    %p54 = scmp.lt.s32.totalorder %s53, 24
    %s55 = scalar_select %p54, %s53, 24
    %s56 = smul.addr %s55, 8
    %s57 = scalar_lea.vmem %s3, %s56
    %s58 = sadd.s32 0, 0
    %p59 = scmp.lt.s32.totalorder %s58, 0
    %s60 = scalar_select %p59, %s58, 0
    %s61 = smul.u32 25, %s60
    %p62 = scmp.lt.s32.totalorder %s61, 24
    %s63 = scalar_select %p62, %s61, 24
    %s64 = smul.addr %s63, 8
    %s65 = scalar_lea.vmem %s0, %s64
    %s66 = sadd.s32 0, 0
    %p67 = scmp.lt.s32.totalorder %s66, 0
    %s68 = scalar_select %p67, %s66, 0
    %s69 = smul.u32 25, %s68
    %s70 = sadd.s32 0, 0
    %p71 = scmp.lt.s32.totalorder %s70, 0
    %s72 = scalar_select %p71, %s70, 0
    %s73 = smul.u32 25, %s72
    %p74 = scmp.lt.s32.totalorder %s73, 24
    %s75 = scalar_select %p74, %s73, 24
    %s76 = smul.addr %s75, 8
    %s77 = scalar_lea.vmem %s3, %s76
    %s78 = sadd.s32 0, 0
    %p79 = scmp.lt.s32.totalorder %s78, 0
    %s80 = scalar_select %p79, %s78, 0
    %s81 = smul.u32 25, %s80
    %p83 = scmp.eq.s32.totalorder 0, 0
    // Predicated region
    $region18: #{tpu_custom_call.1} parent=1 // pred_check
      %p84 = pneg %p83
    $region19: #{tpu_custom_call.1} parent=1 // pred_check_branch
      %86 = sbr.rel (%p84) target = $region21
    $region20: #{tpu_custom_call.1} parent=1 // pred_region
      %s87 = scalar_lea.smem [#allocation2], 0
      %88 = sst [smem:[%s87]] 0.0
    $region21: #{tpu_custom_call.1} parent=1 // pred_fallthru
      _
    %v89 = vld [vmem:[%s65] sm:$0xff]
    %v90 = vld [vmem:[%s65 + $0x8] sm:$0xff]
    %v91 = vld [vmem:[%s65 + $0x10] sm:$0xff]
    %v92 = vld [vmem:[%s65 + $0x18] sm:$0xff]
    %v93 = vld [vmem:[%s65 + $0x20] sm:$0xff]
    %v94 = vld [vmem:[%s65 + $0x28] sm:$0xff]
    %v95 = vld [vmem:[%s65 + $0x30] sm:$0xff]
    %v96 = vld [vmem:[%s65 + $0x38] sm:$0xff]
    %v97 = vld [vmem:[%s65 + $0x40] sm:$0xff]
    %v98 = vld [vmem:[%s65 + $0x48] sm:$0xff]
    %v99 = vld [vmem:[%s65 + $0x50] sm:$0xff]
    %v100 = vld [vmem:[%s65 + $0x58] sm:$0xff]
    %v101 = vld [vmem:[%s65 + $0x60] sm:$0xff]
    %v102 = vld [vmem:[%s65 + $0x68] sm:$0xff]
    %v103 = vld [vmem:[%s65 + $0x70] sm:$0xff]
    %v104 = vld [vmem:[%s65 + $0x78] sm:$0xff]
    %v105 = vld [vmem:[%s65 + $0x80] sm:$0xff]
    %v106 = vld [vmem:[%s65 + $0x88] sm:$0xff]
    %v107 = vld [vmem:[%s65 + $0x90] sm:$0xff]
    %v108 = vld [vmem:[%s65 + $0x98] sm:$0xff]
    %v109 = vld [vmem:[%s65 + $0xa0] sm:$0xff]
    %v110 = vld [vmem:[%s65 + $0xa8] sm:$0xff]
    %v111 = vld [vmem:[%s65 + $0xb0] sm:$0xff]
    %v112 = vld [vmem:[%s65 + $0xb8] sm:$0xff]
    %v113 = vld [vmem:[%s65 + $0xc0] sm:$0xff]
    %v114 = vpack.c.bf16 %v90, %v89
    %v115 = vpack.c.bf16 %v92, %v91
    %v116 = vpack.c.bf16 %v94, %v93
    %v117 = vpack.c.bf16 %v96, %v95
    %v118 = vpack.c.bf16 %v98, %v97
    %v119 = vpack.c.bf16 %v100, %v99
    %v120 = vpack.c.bf16 %v102, %v101
    %v121 = vpack.c.bf16 %v104, %v103
    %v122 = vpack.c.bf16 %v106, %v105
    %v123 = vpack.c.bf16 %v108, %v107
    %v124 = vpack.c.bf16 %v110, %v109
    %v125 = vpack.c.bf16 %v112, %v111
    %v126 = vpack.c.bf16 %v113, %v113
    %v127 = vld [vmem:[%s1] sm:$0xff]
    %v128 = vld [vmem:[%s1 + $0x8] sm:$0xff]
    %v129 = vld [vmem:[%s1 + $0x10] sm:$0xff]
    %v130 = vld [vmem:[%s1 + $0x18] sm:$0xff]
    %v131 = vld [vmem:[%s1 + $0x20] sm:$0xff]
    %v132 = vld [vmem:[%s1 + $0x28] sm:$0xff]
    %v133 = vld [vmem:[%s1 + $0x30] sm:$0xff]
    %v134 = vld [vmem:[%s1 + $0x38] sm:$0xff]
    %v135 = vpack.c.bf16 %v128, %v127
    %v136 = vpack.c.bf16 %v130, %v129
    %v137 = vpack.c.bf16 %v132, %v131
    %v138 = vpack.c.bf16 %v134, %v133
    %v139 = vld [vmem:[%s2] sm:$0x1]
    %v141 = vlaneseq
    %v142 = vshrl.u32 %v141, 7
    %v143 = vsub.s32 0, %v142
    %v144 = vrot.slane %v139, %v143
    %vm146 = vcmask 523264
    %v148 = vsel %vm146, %v114, 0
    %v151 = vsel %vm146, %v115, 0
    %v154 = vsel %vm146, %v116, 0
    %v157 = vsel %vm146, %v117, 0
    %v160 = vsel %vm146, %v118, 0
    %v163 = vsel %vm146, %v119, 0
    %v166 = vsel %vm146, %v120, 0
    %v169 = vsel %vm146, %v121, 0
    %v172 = vsel %vm146, %v122, 0
    %v175 = vsel %vm146, %v123, 0
    %v178 = vsel %vm146, %v124, 0
    %v181 = vsel %vm146, %v125, 0
    %v184 = vsel %vm146, %v126, 0
    %186 = vmatprep.subr.bf16.mxu0 0
    %187 = vmatpush1.bf16.msra.mxu0 %v135
    %188 = vmatprep.subr.bf16.mxu0 0
    %189 = vmatpush1.bf16.msra.mxu0 %v136
    %190 = vmatprep.subr.bf16.mxu0 0
    %191 = vmatpush1.bf16.msra.mxu0 %v137
    %192 = vmatprep.subr.bf16.mxu0 0
    %193 = vmatpush1.bf16.msra.mxu0 %v138
    %194 = vmatprep.subr.bf16.mxu0 0
    %195 = vmatpush1.bf16.msra.mxu0 0
    %196 = vmatprep.subr.bf16.mxu0 0
    %197 = vmatpush1.bf16.msra.mxu0 0
    %198 = vmatprep.subr.bf16.mxu0 0
    %199 = vmatpush1.bf16.msra.mxu0 0
    %200 = vmatprep.subr.bf16.mxu0 0
    %201 = vmatpush1.bf16.msra.mxu0 0
    %202 = vmatprep.subr.bf16.mxu0 0
    %203 = vmatpush1.bf16.msra.mxu0 0
    %204 = vmatprep.subr.bf16.mxu0 0
    %205 = vmatpush1.bf16.msra.mxu0 0
    %206 = vmatprep.subr.bf16.mxu0 0
    %207 = vmatpush1.bf16.msra.mxu0 0
    %208 = vmatprep.subr.bf16.mxu0 0
    %209 = vmatpush1.bf16.msra.mxu0 0
    %210 = vmatprep.subr.bf16.mxu0 0
    %211 = vmatpush1.bf16.msra.mxu0 0
    %212 = vmatprep.subr.bf16.mxu0 0
    %213 = vmatpush1.bf16.msra.mxu0 0
    %214 = vmatprep.subr.bf16.mxu0 0
    %215 = vmatpush1.bf16.msra.mxu0 0
    %216 = vmatprep.subr.bf16.mxu0 0
    %217 = vmatpush1.bf16.msra.mxu0 0
    %218 = vmatprep.mubr.bf16.mxu0 0
    %219 = vmatmul.mubr.bf16.gmra.mrb[0].mxu0 %v148
    %v220 = vpop.f32.mrb[0].mxu0
    %v221 = vadd.f32 %v144, %v220
    %v222 = vpop.f32.mrb[0].mxu0
    %v223 = vpop.f32.mrb[0].mxu0
    %v224 = vadd.f32 %v144, %v223
    %v225 = vpop.f32.mrb[0].mxu0
    %226 = vmatprep.mubr.bf16.mxu0 0
    %227 = vmatmul.mubr.bf16.gmra.mrb[0].mxu0 %v151
    %v228 = vpop.f32.mrb[0].mxu0
    %v229 = vadd.f32 %v144, %v228
    %v230 = vpop.f32.mrb[0].mxu0
    %v231 = vpop.f32.mrb[0].mxu0
    %v232 = vadd.f32 %v144, %v231
    %v233 = vpop.f32.mrb[0].mxu0
    %234 = vmatprep.mubr.bf16.mxu0 0
    %235 = vmatmul.mubr.bf16.gmra.mrb[0].mxu0 %v154
    %v236 = vpop.f32.mrb[0].mxu0
    %v237 = vadd.f32 %v144, %v236
    %v238 = vpop.f32.mrb[0].mxu0
    %v239 = vpop.f32.mrb[0].mxu0
    %v240 = vadd.f32 %v144, %v239
    %v241 = vpop.f32.mrb[0].mxu0
    %242 = vmatprep.mubr.bf16.mxu0 0
    %243 = vmatmul.mubr.bf16.gmra.mrb[0].mxu0 %v157
    %v244 = vpop.f32.mrb[0].mxu0
    %v245 = vadd.f32 %v144, %v244
    %v246 = vpop.f32.mrb[0].mxu0
    %v247 = vpop.f32.mrb[0].mxu0
    %v248 = vadd.f32 %v144, %v247
    %v249 = vpop.f32.mrb[0].mxu0
    %250 = vmatprep.mubr.bf16.mxu0 0
    %251 = vmatmul.mubr.bf16.gmra.mrb[0].mxu0 %v160
    %v252 = vpop.f32.mrb[0].mxu0
    %v253 = vadd.f32 %v144, %v252
    %v254 = vpop.f32.mrb[0].mxu0
    %v255 = vpop.f32.mrb[0].mxu0
    %v256 = vadd.f32 %v144, %v255
    %v257 = vpop.f32.mrb[0].mxu0
    %258 = vmatprep.mubr.bf16.mxu0 0
    %259 = vmatmul.mubr.bf16.gmra.mrb[0].mxu0 %v163
    %v260 = vpop.f32.mrb[0].mxu0
    %v261 = vadd.f32 %v144, %v260
    %v262 = vpop.f32.mrb[0].mxu0
    %v263 = vpop.f32.mrb[0].mxu0
    %v264 = vadd.f32 %v144, %v263
    %v265 = vpop.f32.mrb[0].mxu0
    %266 = vmatprep.mubr.bf16.mxu0 0
    %267 = vmatmul.mubr.bf16.gmra.mrb[0].mxu0 %v166
    %v268 = vpop.f32.mrb[0].mxu0
    %v269 = vadd.f32 %v144, %v268
    %v270 = vpop.f32.mrb[0].mxu0
    %v271 = vpop.f32.mrb[0].mxu0
    %v272 = vadd.f32 %v144, %v271
    %v273 = vpop.f32.mrb[0].mxu0
    %274 = vmatprep.mubr.bf16.mxu0 0
    %275 = vmatmul.mubr.bf16.gmra.mrb[0].mxu0 %v169
    %v276 = vpop.f32.mrb[0].mxu0
    %v277 = vadd.f32 %v144, %v276
    %v278 = vpop.f32.mrb[0].mxu0
    %v279 = vpop.f32.mrb[0].mxu0
    %v280 = vadd.f32 %v144, %v279
    %v281 = vpop.f32.mrb[0].mxu0
    %282 = vmatprep.mubr.bf16.mxu0 0
    %283 = vmatmul.mubr.bf16.gmra.mrb[0].mxu0 %v172
    %v284 = vpop.f32.mrb[0].mxu0
    %v285 = vadd.f32 %v144, %v284
    %v286 = vpop.f32.mrb[0].mxu0
    %v287 = vpop.f32.mrb[0].mxu0
    %v288 = vadd.f32 %v144, %v287
    %v289 = vpop.f32.mrb[0].mxu0
    %290 = vmatprep.mubr.bf16.mxu0 0
    %291 = vmatmul.mubr.bf16.gmra.mrb[0].mxu0 %v175
    %v292 = vpop.f32.mrb[0].mxu0
    %v293 = vadd.f32 %v144, %v292
    %v294 = vpop.f32.mrb[0].mxu0
    %v295 = vpop.f32.mrb[0].mxu0
    %v296 = vadd.f32 %v144, %v295
    %v297 = vpop.f32.mrb[0].mxu0
    %298 = vmatprep.mubr.bf16.mxu0 0
    %299 = vmatmul.mubr.bf16.gmra.mrb[0].mxu0 %v178
    %v300 = vpop.f32.mrb[0].mxu0
    %v301 = vadd.f32 %v144, %v300
    %v302 = vpop.f32.mrb[0].mxu0
    %v303 = vpop.f32.mrb[0].mxu0
    %v304 = vadd.f32 %v144, %v303
    %v305 = vpop.f32.mrb[0].mxu0
    %306 = vmatprep.mubr.bf16.mxu0 0
    %307 = vmatmul.mubr.bf16.gmra.mrb[0].mxu0 %v181
    %v308 = vpop.f32.mrb[0].mxu0
    %v309 = vadd.f32 %v144, %v308
    %v310 = vpop.f32.mrb[0].mxu0
    %v311 = vpop.f32.mrb[0].mxu0
    %v312 = vadd.f32 %v144, %v311
    %v313 = vpop.f32.mrb[0].mxu0
    %314 = vmatprep.mubr.bf16.mxu0 0
    %315 = vmatmul.mubr.bf16.gmra.mrb[0].mxu0 %v184
    %v316 = vpop.f32.mrb[0].mxu0
    %v317 = vadd.f32 %v144, %v316
    %v318 = vpop.f32.mrb[0].mxu0
    %v319 = vpop.f32.mrb[0].mxu0
    %v320 = vpop.f32.mrb[0].mxu0
    %321 = vdwg.mxu0
    %vm322 = vcmask 130048
    %v323 = vsel %vm322, %v221, -inf
    %324 = vmax.xlane.f32.xlu0 %v323
    %v325 = vpop.xlane.xlu0 %324
    %v326 = vsel %vm322, %v224, -inf
    %327 = vmax.xlane.f32.xlu0 %v326
    %v328 = vpop.xlane.xlu0 %327
    %v329 = vsel %vm322, %v229, -inf
    %330 = vmax.xlane.f32.xlu0 %v329
    %v331 = vpop.xlane.xlu0 %330
    %v332 = vsel %vm322, %v232, -inf
    %333 = vmax.xlane.f32.xlu0 %v332
    %v334 = vpop.xlane.xlu0 %333
    %v335 = vsel %vm322, %v237, -inf
    %336 = vmax.xlane.f32.xlu0 %v335
    %v337 = vpop.xlane.xlu0 %336
    %v338 = vsel %vm322, %v240, -inf
    %339 = vmax.xlane.f32.xlu0 %v338
    %v340 = vpop.xlane.xlu0 %339
    %v341 = vsel %vm322, %v245, -inf
    %342 = vmax.xlane.f32.xlu0 %v341
    %v343 = vpop.xlane.xlu0 %342
    %v344 = vsel %vm322, %v248, -inf
    %345 = vmax.xlane.f32.xlu0 %v344
    %v346 = vpop.xlane.xlu0 %345
    %v347 = vsel %vm322, %v253, -inf
    %348 = vmax.xlane.f32.xlu0 %v347
    %v349 = vpop.xlane.xlu0 %348
    %v350 = vsel %vm322, %v256, -inf
    %351 = vmax.xlane.f32.xlu0 %v350
    %v352 = vpop.xlane.xlu0 %351
    %v353 = vsel %vm322, %v261, -inf
    %354 = vmax.xlane.f32.xlu0 %v353
    %v355 = vpop.xlane.xlu0 %354
    %v356 = vsel %vm322, %v264, -inf
    %357 = vmax.xlane.f32.xlu0 %v356
    %v358 = vpop.xlane.xlu0 %357
    %v359 = vsel %vm322, %v269, -inf
    %360 = vmax.xlane.f32.xlu0 %v359
    %v361 = vpop.xlane.xlu0 %360
    %v362 = vsel %vm322, %v272, -inf
    %363 = vmax.xlane.f32.xlu0 %v362
    %v364 = vpop.xlane.xlu0 %363
    %v365 = vsel %vm322, %v277, -inf
    %366 = vmax.xlane.f32.xlu0 %v365
    %v367 = vpop.xlane.xlu0 %366
    %v368 = vsel %vm322, %v280, -inf
    %369 = vmax.xlane.f32.xlu0 %v368
    %v370 = vpop.xlane.xlu0 %369
    %v371 = vsel %vm322, %v285, -inf
    %372 = vmax.xlane.f32.xlu0 %v371
    %v373 = vpop.xlane.xlu0 %372
    %v374 = vsel %vm322, %v288, -inf
    %375 = vmax.xlane.f32.xlu0 %v374
    %v376 = vpop.xlane.xlu0 %375
    %v377 = vsel %vm322, %v293, -inf
    %378 = vmax.xlane.f32.xlu0 %v377
    %v379 = vpop.xlane.xlu0 %378
    %v380 = vsel %vm322, %v296, -inf
    %381 = vmax.xlane.f32.xlu0 %v380
    %v382 = vpop.xlane.xlu0 %381
    %v383 = vsel %vm322, %v301, -inf
    %384 = vmax.xlane.f32.xlu0 %v383
    %v385 = vpop.xlane.xlu0 %384
    %v386 = vsel %vm322, %v304, -inf
    %387 = vmax.xlane.f32.xlu0 %v386
    %v388 = vpop.xlane.xlu0 %387
    %v389 = vsel %vm322, %v309, -inf
    %390 = vmax.xlane.f32.xlu0 %v389
    %v391 = vpop.xlane.xlu0 %390
    %v392 = vsel %vm322, %v312, -inf
    %393 = vmax.xlane.f32.xlu0 %v392
    %v394 = vpop.xlane.xlu0 %393
    %v395 = vsel %vm322, %v317, -inf
    %396 = vmax.xlane.f32.xlu0 %v395
    %v397 = vpop.xlane.xlu0 %396
    %v398 = vsub.f32 %v221, %v325
    %v399 = vsub.f32 %v224, %v328
    %v400 = vsub.f32 %v229, %v331
    %v401 = vsub.f32 %v232, %v334
    %v402 = vsub.f32 %v237, %v337
    %v403 = vsub.f32 %v240, %v340
    %v404 = vsub.f32 %v245, %v343
    %v405 = vsub.f32 %v248, %v346
    %v406 = vsub.f32 %v253, %v349
    %v407 = vsub.f32 %v256, %v352
    %v408 = vsub.f32 %v261, %v355
    %v409 = vsub.f32 %v264, %v358
    %v410 = vsub.f32 %v269, %v361
    %v411 = vsub.f32 %v272, %v364
    %v412 = vsub.f32 %v277, %v367
    %v413 = vsub.f32 %v280, %v370
    %v414 = vsub.f32 %v285, %v373
    %v415 = vsub.f32 %v288, %v376
    %v416 = vsub.f32 %v293, %v379
    %v417 = vsub.f32 %v296, %v382
    %v418 = vsub.f32 %v301, %v385
    %v419 = vsub.f32 %v304, %v388
    %v420 = vsub.f32 %v309, %v391
    %v421 = vsub.f32 %v312, %v394
    %v422 = vsub.f32 %v317, %v397
    %v423 = vmul.f32 %v398, 1.442695
    %v424 = vpow.pop %v423
    %v425 = vmul.f32 %v399, 1.442695
    %v426 = vpow.pop %v425
    %v427 = vmul.f32 %v400, 1.442695
    %v428 = vpow.pop %v427
    %v429 = vmul.f32 %v401, 1.442695
    %v430 = vpow.pop %v429
    %v431 = vmul.f32 %v402, 1.442695
    %v432 = vpow.pop %v431
    %v433 = vmul.f32 %v403, 1.442695
    %v434 = vpow.pop %v433
    %v435 = vmul.f32 %v404, 1.442695
    %v436 = vpow.pop %v435
    %v437 = vmul.f32 %v405, 1.442695
    %v438 = vpow.pop %v437
    %v439 = vmul.f32 %v406, 1.442695
    %v440 = vpow.pop %v439
    %v441 = vmul.f32 %v407, 1.442695
    %v442 = vpow.pop %v441
    %v443 = vmul.f32 %v408, 1.442695
    %v444 = vpow.pop %v443
    %v445 = vmul.f32 %v409, 1.442695
    %v446 = vpow.pop %v445
    %v447 = vmul.f32 %v410, 1.442695
    %v448 = vpow.pop %v447
    %v449 = vmul.f32 %v411, 1.442695
    %v450 = vpow.pop %v449
    %v451 = vmul.f32 %v412, 1.442695
    %v452 = vpow.pop %v451
    %v453 = vmul.f32 %v413, 1.442695
    %v454 = vpow.pop %v453
    %v455 = vmul.f32 %v414, 1.442695
    %v456 = vpow.pop %v455
    %v457 = vmul.f32 %v415, 1.442695
    %v458 = vpow.pop %v457
    %v459 = vmul.f32 %v416, 1.442695
    %v460 = vpow.pop %v459
    %v461 = vmul.f32 %v417, 1.442695
    %v462 = vpow.pop %v461
    %v463 = vmul.f32 %v418, 1.442695
    %v464 = vpow.pop %v463
    %v465 = vmul.f32 %v419, 1.442695
    %v466 = vpow.pop %v465
    %v467 = vmul.f32 %v420, 1.442695
    %v468 = vpow.pop %v467
    %v469 = vmul.f32 %v421, 1.442695
    %v470 = vpow.pop %v469
    %v471 = vmul.f32 %v422, 1.442695
    %v472 = vpow.pop %v471
    %v473 = vsel %vm322, %v424, 0.0
    %474 = vadd.xlane.f32.xlu0 %v473
    %v475 = vpop.xlane.xlu0 %474
    %v476 = vsel %vm322, %v426, 0.0
    %477 = vadd.xlane.f32.xlu0 %v476
    %v478 = vpop.xlane.xlu0 %477
    %v479 = vsel %vm322, %v428, 0.0
    %480 = vadd.xlane.f32.xlu0 %v479
    %v481 = vpop.xlane.xlu0 %480
    %v482 = vsel %vm322, %v430, 0.0
    %483 = vadd.xlane.f32.xlu0 %v482
    %v484 = vpop.xlane.xlu0 %483
    %v485 = vsel %vm322, %v432, 0.0
    %486 = vadd.xlane.f32.xlu0 %v485
    %v487 = vpop.xlane.xlu0 %486
    %v488 = vsel %vm322, %v434, 0.0
    %489 = vadd.xlane.f32.xlu0 %v488
    %v490 = vpop.xlane.xlu0 %489
    %v491 = vsel %vm322, %v436, 0.0
    %492 = vadd.xlane.f32.xlu0 %v491
    %v493 = vpop.xlane.xlu0 %492
    %v494 = vsel %vm322, %v438, 0.0
    %495 = vadd.xlane.f32.xlu0 %v494
    %v496 = vpop.xlane.xlu0 %495
    %v497 = vsel %vm322, %v440, 0.0
    %498 = vadd.xlane.f32.xlu0 %v497
    %v499 = vpop.xlane.xlu0 %498
    %v500 = vsel %vm322, %v442, 0.0
    %501 = vadd.xlane.f32.xlu0 %v500
    %v502 = vpop.xlane.xlu0 %501
    %v503 = vsel %vm322, %v444, 0.0
    %504 = vadd.xlane.f32.xlu0 %v503
    %v505 = vpop.xlane.xlu0 %504
    %v506 = vsel %vm322, %v446, 0.0
    %507 = vadd.xlane.f32.xlu0 %v506
    %v508 = vpop.xlane.xlu0 %507
    %v509 = vsel %vm322, %v448, 0.0
    %510 = vadd.xlane.f32.xlu0 %v509
    %v511 = vpop.xlane.xlu0 %510
    %v512 = vsel %vm322, %v450, 0.0
    %513 = vadd.xlane.f32.xlu0 %v512
    %v514 = vpop.xlane.xlu0 %513
    %v515 = vsel %vm322, %v452, 0.0
    %516 = vadd.xlane.f32.xlu0 %v515
    %v517 = vpop.xlane.xlu0 %516
    %v518 = vsel %vm322, %v454, 0.0
    %519 = vadd.xlane.f32.xlu0 %v518
    %v520 = vpop.xlane.xlu0 %519
    %v521 = vsel %vm322, %v456, 0.0
    %522 = vadd.xlane.f32.xlu0 %v521
    %v523 = vpop.xlane.xlu0 %522
    %v524 = vsel %vm322, %v458, 0.0
    %525 = vadd.xlane.f32.xlu0 %v524
    %v526 = vpop.xlane.xlu0 %525
    %v527 = vsel %vm322, %v460, 0.0
    %528 = vadd.xlane.f32.xlu0 %v527
    %v529 = vpop.xlane.xlu0 %528
    %v530 = vsel %vm322, %v462, 0.0
    %531 = vadd.xlane.f32.xlu0 %v530
    %v532 = vpop.xlane.xlu0 %531
    %v533 = vsel %vm322, %v464, 0.0
    %534 = vadd.xlane.f32.xlu0 %v533
    %v535 = vpop.xlane.xlu0 %534
    %v536 = vsel %vm322, %v466, 0.0
    %537 = vadd.xlane.f32.xlu0 %v536
    %v538 = vpop.xlane.xlu0 %537
    %v539 = vsel %vm322, %v468, 0.0
    %540 = vadd.xlane.f32.xlu0 %v539
    %v541 = vpop.xlane.xlu0 %540
    %v542 = vsel %vm322, %v470, 0.0
    %543 = vadd.xlane.f32.xlu0 %v542
    %v544 = vpop.xlane.xlu0 %543
    %v545 = vsel %vm322, %v472, 0.0
    %546 = vadd.xlane.f32.xlu0 %v545
    %v547 = vpop.xlane.xlu0 %546
    %v548 = vlog2.pop %v475
    %v549 = vmul.f32 %v548, 0.6931472
    %v550 = vlog2.pop %v478
    %v551 = vmul.f32 %v550, 0.6931472
    %v552 = vlog2.pop %v481
    %v553 = vmul.f32 %v552, 0.6931472
    %v554 = vlog2.pop %v484
    %v555 = vmul.f32 %v554, 0.6931472
    %v556 = vlog2.pop %v487
    %v557 = vmul.f32 %v556, 0.6931472
    %v558 = vlog2.pop %v490
    %v559 = vmul.f32 %v558, 0.6931472
    %v560 = vlog2.pop %v493
    %v561 = vmul.f32 %v560, 0.6931472
    %v562 = vlog2.pop %v496
    %v563 = vmul.f32 %v562, 0.6931472
    %v564 = vlog2.pop %v499
    %v565 = vmul.f32 %v564, 0.6931472
    %v566 = vlog2.pop %v502
    %v567 = vmul.f32 %v566, 0.6931472
    %v568 = vlog2.pop %v505
    %v569 = vmul.f32 %v568, 0.6931472
    %v570 = vlog2.pop %v508
    %v571 = vmul.f32 %v570, 0.6931472
    %v572 = vlog2.pop %v511
    %v573 = vmul.f32 %v572, 0.6931472
    %v574 = vlog2.pop %v514
    %v575 = vmul.f32 %v574, 0.6931472
    %v576 = vlog2.pop %v517
    %v577 = vmul.f32 %v576, 0.6931472
    %v578 = vlog2.pop %v520
    %v579 = vmul.f32 %v578, 0.6931472
    %v580 = vlog2.pop %v523
    %v581 = vmul.f32 %v580, 0.6931472
    %v582 = vlog2.pop %v526
    %v583 = vmul.f32 %v582, 0.6931472
    %v584 = vlog2.pop %v529
    %v585 = vmul.f32 %v584, 0.6931472
    %v586 = vlog2.pop %v532
    %v587 = vmul.f32 %v586, 0.6931472
    %v588 = vlog2.pop %v535
    %v589 = vmul.f32 %v588, 0.6931472
    %v590 = vlog2.pop %v538
    %v591 = vmul.f32 %v590, 0.6931472
    %v592 = vlog2.pop %v541
    %v593 = vmul.f32 %v592, 0.6931472
    %v594 = vlog2.pop %v544
    %v595 = vmul.f32 %v594, 0.6931472
    %v596 = vlog2.pop %v547
    %v597 = vmul.f32 %v596, 0.6931472
    %v598 = vld [vmem:[%s77] sm:$0xff]
    %v599 = vld [vmem:[%s77 + $0x8] sm:$0xff]
    %v600 = vld [vmem:[%s77 + $0x10] sm:$0xff]
    %v601 = vld [vmem:[%s77 + $0x18] sm:$0xff]
    %v602 = vld [vmem:[%s77 + $0x20] sm:$0xff]
    %v603 = vld [vmem:[%s77 + $0x28] sm:$0xff]
    %v604 = vld [vmem:[%s77 + $0x30] sm:$0xff]
    %v605 = vld [vmem:[%s77 + $0x38] sm:$0xff]
    %v606 = vld [vmem:[%s77 + $0x40] sm:$0xff]
    %v607 = vld [vmem:[%s77 + $0x48] sm:$0xff]
    %v608 = vld [vmem:[%s77 + $0x50] sm:$0xff]
    %v609 = vld [vmem:[%s77 + $0x58] sm:$0xff]
    %v610 = vld [vmem:[%s77 + $0x60] sm:$0xff]
    %v611 = vld [vmem:[%s77 + $0x68] sm:$0xff]
    %v612 = vld [vmem:[%s77 + $0x70] sm:$0xff]
    %v613 = vld [vmem:[%s77 + $0x78] sm:$0xff]
    %v614 = vld [vmem:[%s77 + $0x80] sm:$0xff]
    %v615 = vld [vmem:[%s77 + $0x88] sm:$0xff]
    %v616 = vld [vmem:[%s77 + $0x90] sm:$0xff]
    %v617 = vld [vmem:[%s77 + $0x98] sm:$0xff]
    %v618 = vld [vmem:[%s77 + $0xa0] sm:$0xff]
    %v619 = vld [vmem:[%s77 + $0xa8] sm:$0xff]
    %v620 = vld [vmem:[%s77 + $0xb0] sm:$0xff]
    %v621 = vld [vmem:[%s77 + $0xb8] sm:$0xff]
    %v622 = vld [vmem:[%s77 + $0xc0] sm:$0xff]
    %v648 = vlaneseq
    %v649 = vand.u32 %v648, 127
    %650 = vset.pattern.permute.xlu0 0
    %651 = vperm.xlu0 %650, %v598
    %v652 = vpop.permute.xlu0 %651
    %653 = vset.pattern.permute.xlu0 0
    %654 = vperm.xlu0 %653, %v599
    %v655 = vpop.permute.xlu0 %654
    %656 = vset.pattern.permute.xlu0 0
    %657 = vperm.xlu0 %656, %v600
    %v658 = vpop.permute.xlu0 %657
    %659 = vset.pattern.permute.xlu0 0
    %660 = vperm.xlu0 %659, %v601
    %v661 = vpop.permute.xlu0 %660
    %662 = vset.pattern.permute.xlu0 0
    %663 = vperm.xlu0 %662, %v602
    %v664 = vpop.permute.xlu0 %663
    %665 = vset.pattern.permute.xlu0 0
    %666 = vperm.xlu0 %665, %v603
    %v667 = vpop.permute.xlu0 %666
    %668 = vset.pattern.permute.xlu0 0
    %669 = vperm.xlu0 %668, %v604
    %v670 = vpop.permute.xlu0 %669
    %671 = vset.pattern.permute.xlu0 0
    %672 = vperm.xlu0 %671, %v605
    %v673 = vpop.permute.xlu0 %672
    %674 = vset.pattern.permute.xlu0 0
    %675 = vperm.xlu0 %674, %v606
    %v676 = vpop.permute.xlu0 %675
    %677 = vset.pattern.permute.xlu0 0
    %678 = vperm.xlu0 %677, %v607
    %v679 = vpop.permute.xlu0 %678
    %680 = vset.pattern.permute.xlu0 0
    %681 = vperm.xlu0 %680, %v608
    %v682 = vpop.permute.xlu0 %681
    %683 = vset.pattern.permute.xlu0 0
    %684 = vperm.xlu0 %683, %v609
    %v685 = vpop.permute.xlu0 %684
    %686 = vset.pattern.permute.xlu0 0
    %687 = vperm.xlu0 %686, %v610
    %v688 = vpop.permute.xlu0 %687
    %689 = vset.pattern.permute.xlu0 0
    %690 = vperm.xlu0 %689, %v611
    %v691 = vpop.permute.xlu0 %690
    %692 = vset.pattern.permute.xlu0 0
    %693 = vperm.xlu0 %692, %v612
    %v694 = vpop.permute.xlu0 %693
    %695 = vset.pattern.permute.xlu0 0
    %696 = vperm.xlu0 %695, %v613
    %v697 = vpop.permute.xlu0 %696
    %698 = vset.pattern.permute.xlu0 0
    %699 = vperm.xlu0 %698, %v614
    %v700 = vpop.permute.xlu0 %699
    %701 = vset.pattern.permute.xlu0 0
    %702 = vperm.xlu0 %701, %v615
    %v703 = vpop.permute.xlu0 %702
    %704 = vset.pattern.permute.xlu0 0
    %705 = vperm.xlu0 %704, %v616
    %v706 = vpop.permute.xlu0 %705
    %707 = vset.pattern.permute.xlu0 0
    %708 = vperm.xlu0 %707, %v617
    %v709 = vpop.permute.xlu0 %708
    %710 = vset.pattern.permute.xlu0 0
    %711 = vperm.xlu0 %710, %v618
    %v712 = vpop.permute.xlu0 %711
    %713 = vset.pattern.permute.xlu0 0
    %714 = vperm.xlu0 %713, %v619
    %v715 = vpop.permute.xlu0 %714
    %716 = vset.pattern.permute.xlu0 0
    %717 = vperm.xlu0 %716, %v620
    %v718 = vpop.permute.xlu0 %717
    %719 = vset.pattern.permute.xlu0 0
    %720 = vperm.xlu0 %719, %v621
    %v721 = vpop.permute.xlu0 %720
    %722 = vset.pattern.permute.xlu0 0
    %723 = vperm.xlu0 %722, %v622
    %v724 = vpop.permute.xlu0 %723
    %vm725 = vcmp.eq.s32.totalorder %v649, %v652
    %vm726 = vcmp.eq.s32.totalorder %v649, %v655
    %vm727 = vcmp.eq.s32.totalorder %v649, %v658
    %vm728 = vcmp.eq.s32.totalorder %v649, %v661
    %vm729 = vcmp.eq.s32.totalorder %v649, %v664
    %vm730 = vcmp.eq.s32.totalorder %v649, %v667
    %vm731 = vcmp.eq.s32.totalorder %v649, %v670
    %vm732 = vcmp.eq.s32.totalorder %v649, %v673
    %vm733 = vcmp.eq.s32.totalorder %v649, %v676
    %vm734 = vcmp.eq.s32.totalorder %v649, %v679
    %vm735 = vcmp.eq.s32.totalorder %v649, %v682
    %vm736 = vcmp.eq.s32.totalorder %v649, %v685
    %vm737 = vcmp.eq.s32.totalorder %v649, %v688
    %vm738 = vcmp.eq.s32.totalorder %v649, %v691
    %vm739 = vcmp.eq.s32.totalorder %v649, %v694
    %vm740 = vcmp.eq.s32.totalorder %v649, %v697
    %vm741 = vcmp.eq.s32.totalorder %v649, %v700
    %vm742 = vcmp.eq.s32.totalorder %v649, %v703
    %vm743 = vcmp.eq.s32.totalorder %v649, %v706
    %vm744 = vcmp.eq.s32.totalorder %v649, %v709
    %vm745 = vcmp.eq.s32.totalorder %v649, %v712
    %vm746 = vcmp.eq.s32.totalorder %v649, %v715
    %vm747 = vcmp.eq.s32.totalorder %v649, %v718
    %vm748 = vcmp.eq.s32.totalorder %v649, %v721
    %vm749 = vcmp.eq.s32.totalorder %v649, %v724
    %v750 = vsel %vm725, 1, 0
    %v751 = vsel %vm726, 1, 0
    %v752 = vsel %vm727, 1, 0
    %v753 = vsel %vm728, 1, 0
    %v754 = vsel %vm729, 1, 0
    %v755 = vsel %vm730, 1, 0
    %v756 = vsel %vm731, 1, 0
    %v757 = vsel %vm732, 1, 0
    %v758 = vsel %vm733, 1, 0
    %v759 = vsel %vm734, 1, 0
    %v760 = vsel %vm735, 1, 0
    %v761 = vsel %vm736, 1, 0
    %v762 = vsel %vm737, 1, 0
    %v763 = vsel %vm738, 1, 0
    %v764 = vsel %vm739, 1, 0
    %v765 = vsel %vm740, 1, 0
    %v766 = vsel %vm741, 1, 0
    %v767 = vsel %vm742, 1, 0
    %v768 = vsel %vm743, 1, 0
    %v769 = vsel %vm744, 1, 0
    %v770 = vsel %vm745, 1, 0
    %v771 = vsel %vm746, 1, 0
    %v772 = vsel %vm747, 1, 0
    %v773 = vsel %vm748, 1, 0
    %v774 = vsel %vm749, 1, 0
    %v775 = vcvt.s32.f32 %v750
    %v776 = vcvt.s32.f32 %v751
    %v777 = vcvt.s32.f32 %v752
    %v778 = vcvt.s32.f32 %v753
    %v779 = vcvt.s32.f32 %v754
    %v780 = vcvt.s32.f32 %v755
    %v781 = vcvt.s32.f32 %v756
    %v782 = vcvt.s32.f32 %v757
    %v783 = vcvt.s32.f32 %v758
    %v784 = vcvt.s32.f32 %v759
    %v785 = vcvt.s32.f32 %v760
    %v786 = vcvt.s32.f32 %v761
    %v787 = vcvt.s32.f32 %v762
    %v788 = vcvt.s32.f32 %v763
    %v789 = vcvt.s32.f32 %v764
    %v790 = vcvt.s32.f32 %v765
    %v791 = vcvt.s32.f32 %v766
    %v792 = vcvt.s32.f32 %v767
    %v793 = vcvt.s32.f32 %v768
    %v794 = vcvt.s32.f32 %v769
    %v795 = vcvt.s32.f32 %v770
    %v796 = vcvt.s32.f32 %v771
    %v797 = vcvt.s32.f32 %v772
    %v798 = vcvt.s32.f32 %v773
    %v799 = vcvt.s32.f32 %v774
    %v800 = vmul.f32 %v775, %v398
    %v801 = vmul.f32 %v776, %v399
    %v802 = vmul.f32 %v777, %v400
    %v803 = vmul.f32 %v778, %v401
    %v804 = vmul.f32 %v779, %v402
    %v805 = vmul.f32 %v780, %v403
    %v806 = vmul.f32 %v781, %v404
    %v807 = vmul.f32 %v782, %v405
    %v808 = vmul.f32 %v783, %v406
    %v809 = vmul.f32 %v784, %v407
    %v810 = vmul.f32 %v785, %v408
    %v811 = vmul.f32 %v786, %v409
    %v812 = vmul.f32 %v787, %v410
    %v813 = vmul.f32 %v788, %v411
    %v814 = vmul.f32 %v789, %v412
    %v815 = vmul.f32 %v790, %v413
    %v816 = vmul.f32 %v791, %v414
    %v817 = vmul.f32 %v792, %v415
    %v818 = vmul.f32 %v793, %v416
    %v819 = vmul.f32 %v794, %v417
    %v820 = vmul.f32 %v795, %v418
    %v821 = vmul.f32 %v796, %v419
    %v822 = vmul.f32 %v797, %v420
    %v823 = vmul.f32 %v798, %v421
    %v824 = vmul.f32 %v799, %v422
    %v825 = vsel %vm322, %v800, 0.0
    %826 = vadd.xlane.f32.xlu0 %v825
    %v827 = vpop.xlane.xlu0 %826
    %v828 = vsel %vm322, %v801, 0.0
    %829 = vadd.xlane.f32.xlu0 %v828
    %v830 = vpop.xlane.xlu0 %829
    %v831 = vsel %vm322, %v802, 0.0
    %832 = vadd.xlane.f32.xlu0 %v831
    %v833 = vpop.xlane.xlu0 %832
    %v834 = vsel %vm322, %v803, 0.0
    %835 = vadd.xlane.f32.xlu0 %v834
    %v836 = vpop.xlane.xlu0 %835
    %v837 = vsel %vm322, %v804, 0.0
    %838 = vadd.xlane.f32.xlu0 %v837
    %v839 = vpop.xlane.xlu0 %838
    %v840 = vsel %vm322, %v805, 0.0
    %841 = vadd.xlane.f32.xlu0 %v840
    %v842 = vpop.xlane.xlu0 %841
    %v843 = vsel %vm322, %v806, 0.0
    %844 = vadd.xlane.f32.xlu0 %v843
    %v845 = vpop.xlane.xlu0 %844
    %v846 = vsel %vm322, %v807, 0.0
    %847 = vadd.xlane.f32.xlu0 %v846
    %v848 = vpop.xlane.xlu0 %847
    %v849 = vsel %vm322, %v808, 0.0
    %850 = vadd.xlane.f32.xlu0 %v849
    %v851 = vpop.xlane.xlu0 %850
    %v852 = vsel %vm322, %v809, 0.0
    %853 = vadd.xlane.f32.xlu0 %v852
    %v854 = vpop.xlane.xlu0 %853
    %v855 = vsel %vm322, %v810, 0.0
    %856 = vadd.xlane.f32.xlu0 %v855
    %v857 = vpop.xlane.xlu0 %856
    %v858 = vsel %vm322, %v811, 0.0
    %859 = vadd.xlane.f32.xlu0 %v858
    %v860 = vpop.xlane.xlu0 %859
    %v861 = vsel %vm322, %v812, 0.0
    %862 = vadd.xlane.f32.xlu0 %v861
    %v863 = vpop.xlane.xlu0 %862
    %v864 = vsel %vm322, %v813, 0.0
    %865 = vadd.xlane.f32.xlu0 %v864
    %v866 = vpop.xlane.xlu0 %865
    %v867 = vsel %vm322, %v814, 0.0
    %868 = vadd.xlane.f32.xlu0 %v867
    %v869 = vpop.xlane.xlu0 %868
    %v870 = vsel %vm322, %v815, 0.0
    %871 = vadd.xlane.f32.xlu0 %v870
    %v872 = vpop.xlane.xlu0 %871
    %v873 = vsel %vm322, %v816, 0.0
    %874 = vadd.xlane.f32.xlu0 %v873
    %v875 = vpop.xlane.xlu0 %874
    %v876 = vsel %vm322, %v817, 0.0
    %877 = vadd.xlane.f32.xlu0 %v876
    %v878 = vpop.xlane.xlu0 %877
    %v879 = vsel %vm322, %v818, 0.0
    %880 = vadd.xlane.f32.xlu0 %v879
    %v881 = vpop.xlane.xlu0 %880
    %v882 = vsel %vm322, %v819, 0.0
    %883 = vadd.xlane.f32.xlu0 %v882
    %v884 = vpop.xlane.xlu0 %883
    %v885 = vsel %vm322, %v820, 0.0
    %886 = vadd.xlane.f32.xlu0 %v885
    %v887 = vpop.xlane.xlu0 %886
    %v888 = vsel %vm322, %v821, 0.0
    %889 = vadd.xlane.f32.xlu0 %v888
    %v890 = vpop.xlane.xlu0 %889
    %v891 = vsel %vm322, %v822, 0.0
    %892 = vadd.xlane.f32.xlu0 %v891
    %v893 = vpop.xlane.xlu0 %892
    %v894 = vsel %vm322, %v823, 0.0
    %895 = vadd.xlane.f32.xlu0 %v894
    %v896 = vpop.xlane.xlu0 %895
    %v897 = vsel %vm322, %v824, 0.0
    %898 = vadd.xlane.f32.xlu0 %v897
    %v899 = vpop.xlane.xlu0 %898
    %v900 = vsub.f32 %v827, %v549
    %v901 = vsub.f32 %v830, %v551
    %v902 = vsub.f32 %v833, %v553
    %v903 = vsub.f32 %v836, %v555
    %v904 = vsub.f32 %v839, %v557
    %v905 = vsub.f32 %v842, %v559
    %v906 = vsub.f32 %v845, %v561
    %v907 = vsub.f32 %v848, %v563
    %v908 = vsub.f32 %v851, %v565
    %v909 = vsub.f32 %v854, %v567
    %v910 = vsub.f32 %v857, %v569
    %v911 = vsub.f32 %v860, %v571
    %v912 = vsub.f32 %v863, %v573
    %v913 = vsub.f32 %v866, %v575
    %v914 = vsub.f32 %v869, %v577
    %v915 = vsub.f32 %v872, %v579
    %v916 = vsub.f32 %v875, %v581
    %v917 = vsub.f32 %v878, %v583
    %v918 = vsub.f32 %v881, %v585
    %v919 = vsub.f32 %v884, %v587
    %v920 = vsub.f32 %v887, %v589
    %v921 = vsub.f32 %v890, %v591
    %v922 = vsub.f32 %v893, %v593
    %v923 = vsub.f32 %v896, %v595
    %v924 = vsub.f32 %v899, %v597
    %s925 = sadd.s32 0, 0
    %s926 = smul.u32 %s925, 200
    %v927 = vlaneseq
    %v928 = vshrl.u32 %v927, 7
    %v929 = vadd.s32 %v928, 8
    %v930 = vadd.s32 %v928, 16
    %v931 = vadd.s32 %v928, 24
    %v932 = vadd.s32 %v928, 32
    %v933 = vadd.s32 %v928, 40
    %v934 = vadd.s32 %v928, 48
    %v935 = vadd.s32 %v928, 56
    %v936 = vadd.s32 %v928, 64
    %v937 = vadd.s32 %v928, 72
    %v938 = vadd.s32 %v928, 80
    %v939 = vadd.s32 %v928, 88
    %v940 = vadd.s32 %v928, 96
    %v941 = vadd.s32 %v928, 104
    %v942 = vadd.s32 %v928, 112
    %v943 = vadd.s32 %v928, 120
    %v944 = vadd.s32 %v928, 128
    %v945 = vadd.s32 %v928, 136
    %v946 = vadd.s32 %v928, 144
    %v947 = vadd.s32 %v928, 152
    %v948 = vadd.s32 %v928, 160
    %v949 = vadd.s32 %v928, 168
    %v950 = vadd.s32 %v928, 176
    %v951 = vadd.s32 %v928, 184
    %v952 = vadd.s32 %v928, 192
    %v953 = vstv %s926
    %v954 = vadd.s32 %v953, %v928
    %v955 = vadd.s32 %v953, %v929
    %v956 = vadd.s32 %v953, %v930
    %v957 = vadd.s32 %v953, %v931
    %v958 = vadd.s32 %v953, %v932
    %v959 = vadd.s32 %v953, %v933
    %v960 = vadd.s32 %v953, %v934
    %v961 = vadd.s32 %v953, %v935
    %v962 = vadd.s32 %v953, %v936
    %v963 = vadd.s32 %v953, %v937
    %v964 = vadd.s32 %v953, %v938
    %v965 = vadd.s32 %v953, %v939
    %v966 = vadd.s32 %v953, %v940
    %v967 = vadd.s32 %v953, %v941
    %v968 = vadd.s32 %v953, %v942
    %v969 = vadd.s32 %v953, %v943
    %v970 = vadd.s32 %v953, %v944
    %v971 = vadd.s32 %v953, %v945
    %v972 = vadd.s32 %v953, %v946
    %v973 = vadd.s32 %v953, %v947
    %v974 = vadd.s32 %v953, %v948
    %v975 = vadd.s32 %v953, %v949
    %v976 = vadd.s32 %v953, %v950
    %v977 = vadd.s32 %v953, %v951
    %v978 = vadd.s32 %v953, %v952
    %vm979 = vcmp.lt.s32.totalorder %v954, 200
    %vm980 = vcmp.lt.s32.totalorder %v955, 200
    %vm981 = vcmp.lt.s32.totalorder %v956, 200
    %vm982 = vcmp.lt.s32.totalorder %v957, 200
    %vm983 = vcmp.lt.s32.totalorder %v958, 200
    %vm984 = vcmp.lt.s32.totalorder %v959, 200
    %vm985 = vcmp.lt.s32.totalorder %v960, 200
    %vm986 = vcmp.lt.s32.totalorder %v961, 200
    %vm987 = vcmp.lt.s32.totalorder %v962, 200
    %vm988 = vcmp.lt.s32.totalorder %v963, 200
    %vm989 = vcmp.lt.s32.totalorder %v964, 200
    %vm990 = vcmp.lt.s32.totalorder %v965, 200
    %vm991 = vcmp.lt.s32.totalorder %v966, 200
    %vm992 = vcmp.lt.s32.totalorder %v967, 200
    %vm993 = vcmp.lt.s32.totalorder %v968, 200
    %vm994 = vcmp.lt.s32.totalorder %v969, 200
    %vm995 = vcmp.lt.s32.totalorder %v970, 200
    %vm996 = vcmp.lt.s32.totalorder %v971, 200
    %vm997 = vcmp.lt.s32.totalorder %v972, 200
    %vm998 = vcmp.lt.s32.totalorder %v973, 200
    %vm999 = vcmp.lt.s32.totalorder %v974, 200
    %vm1000 = vcmp.lt.s32.totalorder %v975, 200
    %vm1001 = vcmp.lt.s32.totalorder %v976, 200
    %vm1002 = vcmp.lt.s32.totalorder %v977, 200
    %vm1003 = vcmp.lt.s32.totalorder %v978, 200
    %v1004 = vmul.f32 %v598, %v900
    %v1005 = vmul.f32 %v599, %v901
    %v1006 = vmul.f32 %v600, %v902
    %v1007 = vmul.f32 %v601, %v903
    %v1008 = vmul.f32 %v602, %v904
    %v1009 = vmul.f32 %v603, %v905
    %v1010 = vmul.f32 %v604, %v906
    %v1011 = vmul.f32 %v605, %v907
    %v1012 = vmul.f32 %v606, %v908
    %v1013 = vmul.f32 %v607, %v909
    %v1014 = vmul.f32 %v608, %v910
    %v1015 = vmul.f32 %v609, %v911
    %v1016 = vmul.f32 %v610, %v912
    %v1017 = vmul.f32 %v611, %v913
    %v1018 = vmul.f32 %v612, %v914
    %v1019 = vmul.f32 %v613, %v915
    %v1020 = vmul.f32 %v614, %v916
    %v1021 = vmul.f32 %v615, %v917
    %v1022 = vmul.f32 %v616, %v918
    %v1023 = vmul.f32 %v617, %v919
    %v1024 = vmul.f32 %v618, %v920
    %v1025 = vmul.f32 %v619, %v921
    %v1026 = vmul.f32 %v620, %v922
    %v1027 = vmul.f32 %v621, %v923
    %v1028 = vmul.f32 %v622, %v924
    %v1029 = vsel %vm979, %v1004, 0.0
    %v1030 = vsel %vm980, %v1005, 0.0
    %v1031 = vsel %vm981, %v1006, 0.0
    %v1032 = vsel %vm982, %v1007, 0.0
    %v1033 = vsel %vm983, %v1008, 0.0
    %v1034 = vsel %vm984, %v1009, 0.0
    %v1035 = vsel %vm985, %v1010, 0.0
    %v1036 = vsel %vm986, %v1011, 0.0
    %v1037 = vsel %vm987, %v1012, 0.0
    %v1038 = vsel %vm988, %v1013, 0.0
    %v1039 = vsel %vm989, %v1014, 0.0
    %v1040 = vsel %vm990, %v1015, 0.0
    %v1041 = vsel %vm991, %v1016, 0.0
    %v1042 = vsel %vm992, %v1017, 0.0
    %v1043 = vsel %vm993, %v1018, 0.0
    %v1044 = vsel %vm994, %v1019, 0.0
    %v1045 = vsel %vm995, %v1020, 0.0
    %v1046 = vsel %vm996, %v1021, 0.0
    %v1047 = vsel %vm997, %v1022, 0.0
    %v1048 = vsel %vm998, %v1023, 0.0
    %v1049 = vsel %vm999, %v1024, 0.0
    %v1050 = vsel %vm1000, %v1025, 0.0
    %v1051 = vsel %vm1001, %v1026, 0.0
    %v1052 = vsel %vm1002, %v1027, 0.0
    %v1053 = vsel %vm1003, %v1028, 0.0
    %s1054 = sld [smem:[#allocation2]]
    %1080 = vrot.lane.b32.xlu0 %v1029, 127
    %v1081 = vpop.permute.xlu0 %1080
    %1082 = vrot.lane.b32.xlu0 %v1030, 127
    %v1083 = vpop.permute.xlu0 %1082
    %1084 = vrot.lane.b32.xlu0 %v1031, 127
    %v1085 = vpop.permute.xlu0 %1084
    %1086 = vrot.lane.b32.xlu0 %v1032, 127
    %v1087 = vpop.permute.xlu0 %1086
    %1088 = vrot.lane.b32.xlu0 %v1033, 127
    %v1089 = vpop.permute.xlu0 %1088
    %1090 = vrot.lane.b32.xlu0 %v1034, 127
    %v1091 = vpop.permute.xlu0 %1090
    %1092 = vrot.lane.b32.xlu0 %v1035, 127
    %v1093 = vpop.permute.xlu0 %1092
    %1094 = vrot.lane.b32.xlu0 %v1036, 127
    %v1095 = vpop.permute.xlu0 %1094
    %1096 = vrot.lane.b32.xlu0 %v1037, 127
    %v1097 = vpop.permute.xlu0 %1096
    %1098 = vrot.lane.b32.xlu0 %v1038, 127
    %v1099 = vpop.permute.xlu0 %1098
    %1100 = vrot.lane.b32.xlu0 %v1039, 127
    %v1101 = vpop.permute.xlu0 %1100
    %1102 = vrot.lane.b32.xlu0 %v1040, 127
    %v1103 = vpop.permute.xlu0 %1102
    %1104 = vrot.lane.b32.xlu0 %v1041, 127
    %v1105 = vpop.permute.xlu0 %1104
    %1106 = vrot.lane.b32.xlu0 %v1042, 127
    %v1107 = vpop.permute.xlu0 %1106
    %1108 = vrot.lane.b32.xlu0 %v1043, 127
    %v1109 = vpop.permute.xlu0 %1108
    %1110 = vrot.lane.b32.xlu0 %v1044, 127
    %v1111 = vpop.permute.xlu0 %1110
    %1112 = vrot.lane.b32.xlu0 %v1045, 127
    %v1113 = vpop.permute.xlu0 %1112
    %1114 = vrot.lane.b32.xlu0 %v1046, 127
    %v1115 = vpop.permute.xlu0 %1114
    %1116 = vrot.lane.b32.xlu0 %v1047, 127
    %v1117 = vpop.permute.xlu0 %1116
    %1118 = vrot.lane.b32.xlu0 %v1048, 127
    %v1119 = vpop.permute.xlu0 %1118
    %1120 = vrot.lane.b32.xlu0 %v1049, 127
    %v1121 = vpop.permute.xlu0 %1120
    %1122 = vrot.lane.b32.xlu0 %v1050, 127
    %v1123 = vpop.permute.xlu0 %1122
    %1124 = vrot.lane.b32.xlu0 %v1051, 127
    %v1125 = vpop.permute.xlu0 %1124
    %1126 = vrot.lane.b32.xlu0 %v1052, 127
    %v1127 = vpop.permute.xlu0 %1126
    %1128 = vrot.lane.b32.xlu0 %v1053, 127
    %v1129 = vpop.permute.xlu0 %1128
    %vm1155 = vcmask 7168
    %v1156 = vsel %vm1155, %v1081, 0.0
    %v1157 = vsel %vm1155, %v1083, 0.0
    %v1158 = vadd.f32 %v1156, %v1157
    %v1159 = vsel %vm1155, %v1085, 0.0
    %v1160 = vadd.f32 %v1158, %v1159
    %v1161 = vsel %vm1155, %v1087, 0.0
    %v1162 = vadd.f32 %v1160, %v1161
    %v1163 = vsel %vm1155, %v1089, 0.0
    %v1164 = vadd.f32 %v1162, %v1163
    %v1165 = vsel %vm1155, %v1091, 0.0
    %v1166 = vadd.f32 %v1164, %v1165
    %v1167 = vsel %vm1155, %v1093, 0.0
    %v1168 = vadd.f32 %v1166, %v1167
    %v1169 = vsel %vm1155, %v1095, 0.0
    %v1170 = vadd.f32 %v1168, %v1169
    %v1171 = vsel %vm1155, %v1097, 0.0
    %v1172 = vadd.f32 %v1170, %v1171
    %v1173 = vsel %vm1155, %v1099, 0.0
    %v1174 = vadd.f32 %v1172, %v1173
    %v1175 = vsel %vm1155, %v1101, 0.0
    %v1176 = vadd.f32 %v1174, %v1175
    %v1177 = vsel %vm1155, %v1103, 0.0
    %v1178 = vadd.f32 %v1176, %v1177
    %v1179 = vsel %vm1155, %v1105, 0.0
    %v1180 = vadd.f32 %v1178, %v1179
    %v1181 = vsel %vm1155, %v1107, 0.0
    %v1182 = vadd.f32 %v1180, %v1181
    %v1183 = vsel %vm1155, %v1109, 0.0
    %v1184 = vadd.f32 %v1182, %v1183
    %v1185 = vsel %vm1155, %v1111, 0.0
    %v1186 = vadd.f32 %v1184, %v1185
    %v1187 = vsel %vm1155, %v1113, 0.0
    %v1188 = vadd.f32 %v1186, %v1187
    %v1189 = vsel %vm1155, %v1115, 0.0
    %v1190 = vadd.f32 %v1188, %v1189
    %v1191 = vsel %vm1155, %v1117, 0.0
    %v1192 = vadd.f32 %v1190, %v1191
    %v1193 = vsel %vm1155, %v1119, 0.0
    %v1194 = vadd.f32 %v1192, %v1193
    %v1195 = vsel %vm1155, %v1121, 0.0
    %v1196 = vadd.f32 %v1194, %v1195
    %v1197 = vsel %vm1155, %v1123, 0.0
    %v1198 = vadd.f32 %v1196, %v1197
    %v1199 = vsel %vm1155, %v1125, 0.0
    %v1200 = vadd.f32 %v1198, %v1199
    %v1201 = vsel %vm1155, %v1127, 0.0
    %v1202 = vadd.f32 %v1200, %v1201
    %v1203 = vsel %vm1155, %v1129, 0.0
    %v1204 = vadd.f32 %v1202, %v1203
    %1205 = vadd.xlane.f32.xlu0 %v1204
    %v1206 = vpop.xlane.xlu0 %1205
    %v1207 = vrot.slane %v1206, 4
    %v1208 = vadd.f32 %v1206, %v1207
    %v1209 = vrot.slane %v1208, 2
    %v1210 = vadd.f32 %v1208, %v1209
    %v1211 = vrot.slane %v1210, 1
    %v1212 = vadd.f32 %v1210, %v1211
    %s1213 = vtos %v1212
    %s1214 = ssub.f32 0.0, %s1213
    %s1215 = sadd.f32 %s1054, %s1214
    %s1216 = scalar_lea.smem [#allocation2], 0
    %1217 = sst [smem:[%s1216]] %s1215
    // Predicated region
    $region22: #{tpu_custom_call.1} parent=1 // pred_check
      %p1218 = pneg %p83
    $region23: #{tpu_custom_call.1} parent=1 // pred_check_branch
      %1220 = sbr.rel (%p1218) target = $region25
    $region24: #{tpu_custom_call.1} parent=1 // pred_region
      %s1221 = sld [smem:[#allocation2]]
      %v1222 = vstv %s1221
      %1223 = vst [vmem:[#allocation3] sm:$0xff] %v1222
    $region25: #{tpu_custom_call.1} parent=1 // pred_fallthru
      _
    // Predicated region
    $region26: #{tpu_custom_call.1} parent=1 // pred_check
      _
    $region27: #{tpu_custom_call.1} parent=1 // pred_check_branch
      %1225 = sbr.rel (0) target = $region29
    $region28: #{tpu_custom_call.1} parent=1 // pred_region
      %s1227 = ssub.s32 128, 128
      %1228 = vsyncadd [#allocation4], %s1227
      %s1230 = sshll.u32 [#allocation3], 4
      %s1231 = int_to_ptr.vmem [resolvable:$true] %s1230
      %1233 = dma.vmem_to_hbm [thread:$0]  %s1231, 128, %s4, [#allocation4]
    $region29: #{tpu_custom_call.1} parent=1 // pred_fallthru
      _
    // Predicated region
    $region30: #{tpu_custom_call.1} parent=1 // pred_check
      _
    $region31: #{tpu_custom_call.1} parent=1 // pred_check_branch
      %1235 = sbr.rel (0) target = $region33
    $region32: #{tpu_custom_call.1} parent=1 // pred_region
      %1236 = dma.done [#allocation4], 128
    $region33: #{tpu_custom_call.1} parent=1 // pred_fallthru
      _
    %1237 = vsyncpa [#allocation4], 1

</llo_original>
